<compile_context>
chip_gen: v5e
topology: v5e:2x2
jax: 0.10.0
libtpu: 0.0.40
codegen_flags: <defaults>
</compile_context>

<pallas_src>
import functools

import jax
import jax.numpy as jnp
from jax.experimental import pallas as pl
from jax.experimental.pallas import tpu as pltpu


def _round_up(v, m):
    return (v + m - 1) // m * m


def _mmd_kernel(x_ref, c_ref, out_ref, acc_ref, *, scale, inv_d):
    """Accumulates sum_i c_i * x_i over row tiles; finalizes the scalar loss."""
    step = pl.program_id(0)

    @pl.when(step == 0)
    def _init():
        acc_ref[...] = jnp.zeros_like(acc_ref)

    x = x_ref[...].astype(jnp.float32)          # [TILE_N, D_pad]
    c = c_ref[...]                              # [TILE_N, 1]   (f32)
    w = x * c                                   # weighted rows
    tn, dp = w.shape
    # Collapse groups of 8 rows with layout-preserving reshape + leading-axis
    # sum (pure VPU adds); the cross-sublane XLU reduce of the (8, D_pad)
    # accumulator happens only once, in the finalize below.
    acc_ref[...] += jnp.sum(w.reshape(tn // 8, 8, dp), axis=0)

    @pl.when(step == pl.num_programs(0) - 1)
    def _finalize():
        diff = jnp.sum(acc_ref[...], axis=0, keepdims=True)   # [1, D_pad]
        ssq = jnp.sum(diff * diff)        # padded lanes are exactly zero
        out_ref[0, 0] = jnp.float32(scale) * ssq * jnp.float32(inv_d)


def mmd_loss(x, dataset, dataset_num, *, tile_bytes=4 * 1024 * 1024,
             max_rows_per_tile=1024):
    """JAX/Pallas equivalent of MMDLoss(dataset_num)(x, dataset)."""
    if dataset_num <= 1:
        return jnp.float32(0.0)   # PyTorch loop body never runs -> 0.0

    x2d = jnp.squeeze(x)
    assert x2d.ndim == 2, "expected x.squeeze() to be [N, D]"
    n, d = x2d.shape

    # Coefficient column c[N, 1]: diff-of-means = sum_i c_i * x_i.
    ds = dataset.reshape(n).astype(jnp.int32)
    m0 = (ds == 0).astype(jnp.float32)
    m1 = (ds == 1).astype(jnp.float32)
    c = (m0 / jnp.sum(m0) - m1 / jnp.sum(m1)).reshape(n, 1)

    # Lane-align D; pick a row tile (multiple of 8) keeping one x block under
    # ~tile_bytes so 2x double-buffered blocks + scratch fit default VMEM.
    d_pad = _round_up(d, 128)
    itemsize = jnp.dtype(x2d.dtype).itemsize
    rows_budget = max(8, (tile_bytes // (d_pad * itemsize)) // 8 * 8)
    tile_n = int(min(rows_budget, _round_up(max_rows_per_tile, 8),
                     _round_up(n, 8)))
    n_pad = _round_up(n, tile_n)

    if (n_pad, d_pad) != (n, d):
        x_p = jnp.zeros((n_pad, d_pad), x2d.dtype).at[:n, :d].set(x2d)
    else:
        x_p = x2d
    c_p = jnp.zeros((n_pad, 1), jnp.float32).at[:n, :].set(c)

    kernel = functools.partial(_mmd_kernel,
                               scale=float(dataset_num - 1),
                               inv_d=1.0 / float(d))

    # TODO(synk): for very large D on v7x, add a second "parallel" grid axis
    # over 128-lane D tiles so both TensorCores split the feature dim; kept
    # single-axis here so the scalar finalize stays fully in-kernel.
    out = pl.pallas_call(
        kernel,
        out_shape=jax.ShapeDtypeStruct((1, 1), jnp.float32),
        grid=(n_pad // tile_n,),
        in_specs=[
            pl.BlockSpec((tile_n, d_pad), lambda i: (i, 0)),
            pl.BlockSpec((tile_n, 1), lambda i: (i, 0)),
        ],
        out_specs=pl.BlockSpec(memory_space=pltpu.MemorySpace.SMEM),
        scratch_shapes=[pltpu.VMEM((8, d_pad), jnp.float32)],
        compiler_params=pltpu.CompilerParams(
            dimension_semantics=("arbitrary",),   # row axis is a reduction
            vmem_limit_bytes=32 * 1024 * 1024,
        ),
    )(x_p, c_p)
    return out[0, 0]


def mmd_loss_ref(x, dataset, dataset_num):
    """Pure-JAX reference mirroring the PyTorch forward."""
    x2d = jnp.squeeze(x).astype(jnp.float32)
    src = (dataset == 0)
    tgt = (dataset == 1)
    src_mean = jnp.sum(jnp.where(src[:, None], x2d, 0.0), axis=0) / jnp.sum(src)
    tgt_mean = jnp.sum(jnp.where(tgt[:, None], x2d, 0.0), axis=0) / jnp.sum(tgt)
    mse = jnp.mean((src_mean - tgt_mean) ** 2)
    return jnp.float32(dataset_num - 1) * mse


if __name__ == "__main__":
    key = jax.random.PRNGKey(0)
    N, D = 64, 48          # D not 128-aligned -> exercises lane padding
    dataset_num = 3

    # x as it comes out of an upstream model (extra singleton dim, squeezed
    # away like the PyTorch code expects).
    x = jax.random.normal(key, (N, 1, D), dtype=jnp.float32)
    dataset = jnp.array([0, 1] * (N // 2), dtype=jnp.int32)

    # Force several row tiles so the grid-reduction / accumulator path is hit.
    loss = jax.block_until_ready(
        mmd_loss(x, dataset, dataset_num, max_rows_per_tile=16))
    loss_ref = jax.block_until_ready(mmd_loss_ref(x, dataset, dataset_num))

    assert jnp.allclose(loss, loss_ref, rtol=1e-4, atol=1e-6), (loss, loss_ref)
    print("KERNEL_OK")
</pallas_src>

<mosaic_0001>
module attributes {stable_mosaic.version = 11 : i64} {
  func.func @_mmd_kernel(%arg0: i32, %arg1: memref<16x128xf32, #tpu.memory_space<vmem>>, %arg2: memref<16x1xf32, #tpu.memory_space<vmem>>, %arg3: memref<1x1xf32, #tpu.memory_space<smem>>, %arg4: memref<8x128xf32, #tpu.memory_space<vmem>>) attributes {dimension_semantics = [#tpu.dimension_semantics<arbitrary>], iteration_bounds = array<i64: 4>, scalar_prefetch = 0 : i64, scratch_operands = 1 : i64, tpu.core_type = #tpu.core_type<tc>, window_params = [{transform_indices = @transform_0, window_bounds = array<i64: 16, 128>}, {transform_indices = @transform_1, window_bounds = array<i64: 16, 1>}, {transform_indices = @transform_2, window_bounds = array<i64: 1, 1>}]} {
    %c0_i32 = arith.constant 0 : i32
    %0 = arith.cmpi eq, %arg0, %c0_i32 : i32
    %1 = arith.extui %0 : i1 to i32
    %c0_i32_0 = arith.constant 0 : i32
    %2 = arith.cmpi ne, %1, %c0_i32_0 : i32
    scf.if %2 {
      %cst_9 = arith.constant 0.000000e+00 : f32
      %15 = vector.broadcast %cst_9 : f32 to vector<8x128xf32>
      %c0_10 = arith.constant 0 : index
      %c0_11 = arith.constant 0 : index
      %16 = vector.load %arg4[%c0_10, %c0_11] : memref<8x128xf32, #tpu.memory_space<vmem>>, vector<8x128xf32>
      tpu.vector_store %arg4[%c0_10, %c0_11], %15 {strides = array<i32>} : memref<8x128xf32, #tpu.memory_space<vmem>>, vector<8x128xf32>,
    } else {
    }
    %c0 = arith.constant 0 : index
    %c0_1 = arith.constant 0 : index
    %3 = vector.load %arg1[%c0, %c0_1] : memref<16x128xf32, #tpu.memory_space<vmem>>, vector<16x128xf32>
    %c0_2 = arith.constant 0 : index
    %c0_3 = arith.constant 0 : index
    %4 = vector.load %arg2[%c0_2, %c0_3] : memref<16x1xf32, #tpu.memory_space<vmem>>, vector<16x1xf32>
    %5 = vector.broadcast %4 : vector<16x1xf32> to vector<16x128xf32>
    %6 = arith.mulf %3, %5 : vector<16x128xf32>
    %c0_4 = arith.constant 0 : index
    %c0_5 = arith.constant 0 : index
    %7 = vector.load %arg4[%c0_4, %c0_5] : memref<8x128xf32, #tpu.memory_space<vmem>>, vector<8x128xf32>
    %8 = vector.shape_cast %6 : vector<16x128xf32> to vector<2x8x128xf32>
    %cst = arith.constant dense<0.000000e+00> : vector<8x128xf32>
    %9 = vector.multi_reduction <add>, %8, %cst [0] : vector<2x8x128xf32> to vector<8x128xf32>
    %10 = arith.addf %7, %9 : vector<8x128xf32>
    %c0_6 = arith.constant 0 : index
    %c0_7 = arith.constant 0 : index
    %11 = vector.load %arg4[%c0_6, %c0_7] : memref<8x128xf32, #tpu.memory_space<vmem>>, vector<8x128xf32>
    tpu.vector_store %arg4[%c0_6, %c0_7], %10 {strides = array<i32>} : memref<8x128xf32, #tpu.memory_space<vmem>>, vector<8x128xf32>,
    %c3_i32 = arith.constant 3 : i32
    %12 = arith.cmpi eq, %arg0, %c3_i32 : i32
    %13 = arith.extui %12 : i1 to i32
    %c0_i32_8 = arith.constant 0 : i32
    %14 = arith.cmpi ne, %13, %c0_i32_8 : i32
    scf.if %14 {
      %c0_9 = arith.constant 0 : index
      %c0_10 = arith.constant 0 : index
      %15 = vector.load %arg4[%c0_9, %c0_10] : memref<8x128xf32, #tpu.memory_space<vmem>>, vector<8x128xf32>
      %cst_11 = arith.constant dense<0.000000e+00> : vector<128xf32>
      %16 = vector.multi_reduction <add>, %15, %cst_11 [0] : vector<8x128xf32> to vector<128xf32>
      %17 = vector.shape_cast %16 : vector<128xf32> to vector<1x128xf32>
      %18 = arith.mulf %17, %17 : vector<1x128xf32>
      %19 = vector.shape_cast %18 : vector<1x128xf32> to vector<1x1x128xf32>
      %cst_12 = arith.constant dense<0.000000e+00> : vector<1xf32>
      %20 = vector.multi_reduction <add>, %19, %cst_12 [1, 2] : vector<1x1x128xf32> to vector<1xf32>
      %21 = vector.shape_cast %20 : vector<1xf32> to vector<1x1x1xf32>
      %22 = vector.extract %21[0, 0, 0] : f32 from vector<1x1x1xf32>
      %cst_13 = arith.constant 2.000000e+00 : f32
      %23 = arith.mulf %cst_13, %22 : f32
      %cst_14 = arith.constant 0.020833334 : f32
      %24 = arith.mulf %23, %cst_14 : f32
      %c0_15 = arith.constant 0 : index
      %c0_16 = arith.constant 0 : index
      %25 = memref.load %arg3[%c0_15, %c0_16] : memref<1x1xf32, #tpu.memory_space<smem>>
      memref.store %24, %arg3[%c0_15, %c0_16] : memref<1x1xf32, #tpu.memory_space<smem>>
    } else {
    }
    return
  }
  func.func @transform_0(%arg0: i32) -> (i32, i32) {
    %c0_i32 = arith.constant 0 : i32
    %c0_i32_0 = arith.constant 0 : i32
    return %arg0, %c0_i32 : i32, i32
  }
  func.func @transform_1(%arg0: i32) -> (i32, i32) {
    %c0_i32 = arith.constant 0 : i32
    %c0_i32_0 = arith.constant 0 : i32
    return %arg0, %c0_i32 : i32, i32
  }
  func.func @transform_2(%arg0: i32) -> (i32, i32) {
    %c0_i32 = arith.constant 0 : i32
    %c0_i32_0 = arith.constant 0 : i32
    %c0_i32_1 = arith.constant 0 : i32
    return %c0_i32, %c0_i32_0 : i32, i32
  }
}

</mosaic_0001>

<llo_original>
// kernel: tpu_custom_call.1
$region0: #{tpu_custom_call.1}
  #allocation0 [shape = 'u32[]', space=smem, size = 0x4, offset = 0x4, fixed_abs, tag = 'smem constant byte address 0x4 - core index']
  #allocation1 [shape = 'u32[72,128]{1,0:T(1,128)}', space=vmem, size = 0x9000, scoped, tag = 'internal scratch']
  #allocation2 [shape = 'f32[8,128]{1,0:T(8,128)}', space=vmem, size = 0x1000, scoped, tag = 'scratch operand']
  %s0 = inlined_call_operand.vmem [shape: f32[64,128], index: 0, kind: input, shape index: {}]
  %s1 = inlined_call_operand.vmem [shape: f32[64,1], index: 1, kind: input, shape index: {}]
  %s2 = inlined_call_operand.hbm [shape: f32[1,1], index: 2, kind: output, shape index: {}]
  %s3 = sld [smem:[#allocation0]]
  $region49: #{tpu_custom_call.1} parent=0
    _
  %s5 = ssub.s32 1, %s3
  %s6 = scalar_select 0, %s5, %s3
  $region1: #{tpu_custom_call.1} parent=0
    #allocation3 [shape = 'u8[512]{0}', space=smem, size = 0x200, scoped, tag = 'output window, operand 0, single buffered']
    #allocation4 [shape = 's32[2]{0}', space=sflag, size = 0x8, scoped, tag = 'scoped memory for tpu_custom_call.1']
    %7 = vsyncpa [#allocation4], 0
    loop: start=0, step=1, limit=6
    $region2: #{tpu_custom_call.1} parent=1 // loop_pre_header
      _
    $region3: #{tpu_custom_call.1} parent=1 // loop_header
      %s9 = sphi 0, %s13
      %p10 = scmp.ge.s32.totalorder %s9, 6
      %s19 = sphi 0, %s21
      %s22 = sphi 0, %s19
      %s23 = sphi 0, %s22
      %s39 = sphi 0, %s23
      %s45 = sphi 0, %s47
      %s48 = sphi 0, %s45
      %s49 = sphi 0, %s48
      %s65 = sphi 0, %s49
      %s69 = sphi 0, %s69
      %s71 = sphi 0, %s69
      %s72 = sphi 0, %s71
      %s86 = sphi 0, %s72
    $region4: #{tpu_custom_call.1} parent=1 // loop_header_branch
      %12 = sbr.rel (%p10) target = $region8
    $region5: #{tpu_custom_call.1} parent=1 // loop_body
      %s14 = ssub.s32 %s9, 1
      %s15 = ssub.s32 %s9, 2
      %s16 = sadd.s32 %s9, 1
      %s17 = ssub.s32 %s9, %s16
      %p18 = scmp.eq.s32.totalorder %s17, 0
      %s20 = sadd.s32 %s19, 1
      %s21 = scalar_select %p18, %s19, %s20
      %p24 = pneg %p18
      %p25 = scmp.eq.s32.totalorder %s9, 3
      %p26 = por %p24, %p25
      %p27 = scmp.ne.s32.totalorder %s19, %s22
      %p28 = scmp.eq.s32.totalorder %s9, 0
      %p29 = por %p27, %p28
      %p30 = scmp.ne.s32.totalorder %s19, %s22
      %p31 = scmp.eq.s32.totalorder %s14, 3
      %p32 = por %p30, %p31
      %p33 = scmp.ne.s32.totalorder %s22, %s23
      %p34 = scmp.eq.s32.totalorder %s14, 0
      %p35 = por %p33, %p34
      %p36 = scmp.ne.s32.totalorder %s22, %s23
      %p37 = scmp.eq.s32.totalorder %s15, 3
      %p38 = por %p36, %p37
      %p40 = scmp.ne.s32.totalorder %s23, %s39
      %p41 = scmp.eq.s32.totalorder %s15, 0
      %p42 = por %p40, %p41
      %s43 = ssub.s32 %s9, %s16
      %p44 = scmp.eq.s32.totalorder %s43, 0
      %s46 = sadd.s32 %s45, 1
      %s47 = scalar_select %p44, %s45, %s46
      %p50 = pneg %p44
      %p51 = scmp.eq.s32.totalorder %s9, 3
      %p52 = por %p50, %p51
      %p53 = scmp.ne.s32.totalorder %s45, %s48
      %p54 = scmp.eq.s32.totalorder %s9, 0
      %p55 = por %p53, %p54
      %p56 = scmp.ne.s32.totalorder %s45, %s48
      %p57 = scmp.eq.s32.totalorder %s14, 3
      %p58 = por %p56, %p57
      %p59 = scmp.ne.s32.totalorder %s48, %s49
      %p60 = scmp.eq.s32.totalorder %s14, 0
      %p61 = por %p59, %p60
      %p62 = scmp.ne.s32.totalorder %s48, %s49
      %p63 = scmp.eq.s32.totalorder %s15, 3
      %p64 = por %p62, %p63
      %p66 = scmp.ne.s32.totalorder %s49, %s65
      %p67 = scmp.eq.s32.totalorder %s15, 0
      %p68 = por %p66, %p67
      %s70 = sadd.s32 %s69, 1
      %p73 = scmp.eq.s32.totalorder %s9, 3
      %p74 = scmp.ne.s32.totalorder %s69, %s71
      %p75 = scmp.eq.s32.totalorder %s9, 0
      %p76 = por %p74, %p75
      %p77 = scmp.ne.s32.totalorder %s69, %s71
      %p78 = scmp.eq.s32.totalorder %s14, 3
      %p79 = por %p77, %p78
      %p80 = scmp.ne.s32.totalorder %s71, %s72
      %p81 = scmp.eq.s32.totalorder %s14, 0
      %p82 = por %p80, %p81
      %p83 = scmp.ne.s32.totalorder %s71, %s72
      %p84 = scmp.eq.s32.totalorder %s15, 3
      %p85 = por %p83, %p84
      %p87 = scmp.ne.s32.totalorder %s72, %s86
      %p88 = scmp.eq.s32.totalorder %s15, 0
      %p89 = por %p87, %p88
      %p90 = scmp.le.s32.totalorder 1, %s9
      %p91 = scmp.lt.s32.totalorder %s9, 5
      %p92 = pnand %p90, %p91
      %p93 = pneg %p92
      // Predicated region
      $region9: #{tpu_custom_call.1} parent=5 // pred_check
        _
      $region10: #{tpu_custom_call.1} parent=5 // pred_check_branch
        %95 = sbr.rel (%p92) target = $region12
      $region11: #{tpu_custom_call.1} parent=5 // pred_region
        %s96 = ssub.s32 %s9, 1
      $region12: #{tpu_custom_call.1} parent=5 // pred_fallthru
        _
      %p97 = scmp.lt.s32.totalorder %s9, 4
      // Predicated region
      $region13: #{tpu_custom_call.1} parent=5 // pred_check
        %p98 = pneg %p97
      $region14: #{tpu_custom_call.1} parent=5 // pred_check_branch
        %100 = sbr.rel (%p98) target = $region16
      $region15: #{tpu_custom_call.1} parent=5 // pred_region
        // Predicated region
        $region17: #{tpu_custom_call.1} parent=15 // pred_check
          %p101 = pneg %p29
        $region18: #{tpu_custom_call.1} parent=15 // pred_check_branch
          %103 = sbr.rel (%p101) target = $region20
        $region19: #{tpu_custom_call.1} parent=15 // pred_region
          %s104 = smul.u32 2, %s9
          %p105 = scmp.lt.s32.totalorder %s104, 7
          %s106 = scalar_select %p105, %s104, 7
          %s107 = smul.addr %s106, 8
          %s108 = scalar_lea.vmem %s0, %s107
          %s109 = smul.u32 2, %s9
        $region20: #{tpu_custom_call.1} parent=15 // pred_fallthru
          _
        // Predicated region
        $region21: #{tpu_custom_call.1} parent=15 // pred_check
          %p110 = pneg %p55
        $region22: #{tpu_custom_call.1} parent=15 // pred_check_branch
          %112 = sbr.rel (%p110) target = $region24
        $region23: #{tpu_custom_call.1} parent=15 // pred_region
          %s113 = smul.u32 2, %s9
          %p114 = scmp.lt.s32.totalorder %s113, 7
          %s115 = scalar_select %p114, %s113, 7
          %s116 = smul.addr %s115, 8
          %s117 = scalar_lea.vmem %s1, %s116
          %s118 = smul.u32 2, %s9
        $region24: #{tpu_custom_call.1} parent=15 // pred_fallthru
          _
      $region16: #{tpu_custom_call.1} parent=5 // pred_fallthru
        _
      %p119 = scmp.le.s32.totalorder 1, %s9
      %p120 = scmp.lt.s32.totalorder %s9, 5
      %p121 = pnand %p119, %p120
      %p122 = pneg %p121
      // Predicated region
      $region25: #{tpu_custom_call.1} parent=5 // pred_check
        _
      $region26: #{tpu_custom_call.1} parent=5 // pred_check_branch
        %124 = sbr.rel (%p121) target = $region28
      $region27: #{tpu_custom_call.1} parent=5 // pred_region
        %s125 = ssub.s32 %s9, 1
        %s126 = smul.u32 2, %s14
        %p127 = scmp.lt.s32.totalorder %s126, 7
        %s128 = scalar_select %p127, %s126, 7
        %s129 = smul.addr %s128, 8
        %s130 = scalar_lea.vmem %s0, %s129
        %p131 = pneg %p35
        %p132 = pneg %p32
        %s133 = smul.u32 2, %s14
        %p134 = scmp.lt.s32.totalorder %s133, 7
        %s135 = scalar_select %p134, %s133, 7
        %s136 = smul.addr %s135, 8
        %s137 = scalar_lea.vmem %s1, %s136
        %p138 = pneg %p61
        %p139 = pneg %p58
        %p140 = pneg %p82
        %p141 = pneg %p79
        %s142 = smul.u32 2, %s14
        %p143 = scmp.lt.s32.totalorder %s142, 7
        %s144 = scalar_select %p143, %s142, 7
        %s145 = smul.addr %s144, 8
        %s146 = scalar_lea.vmem %s0, %s145
        %s147 = smul.u32 2, %s14
        %s148 = smul.u32 2, %s14
        %p149 = scmp.lt.s32.totalorder %s148, 7
        %s150 = scalar_select %p149, %s148, 7
        %s151 = smul.addr %s150, 8
        %s152 = scalar_lea.vmem %s1, %s151
        %s153 = smul.u32 2, %s14
        %p154 = scmp.eq.s32.totalorder %s14, 0
        // Predicated region
        $region29: #{tpu_custom_call.1} parent=27 // pred_check
          %p155 = pneg %p154
        $region30: #{tpu_custom_call.1} parent=27 // pred_check_branch
          %157 = sbr.rel (%p155) target = $region32
        $region31: #{tpu_custom_call.1} parent=27 // pred_region
          %158 = vst [vmem:[#allocation2] sm:$0xff] 0.0
        $region32: #{tpu_custom_call.1} parent=27 // pred_fallthru
          _
        %v159 = vld [vmem:[%s146] sm:$0xff]
        %v160 = vld [vmem:[%s146 + $0x8] sm:$0xff]
        %v161 = vld [vmem:[%s152] sm:$0xff]
        %v162 = vld [vmem:[%s152 + $0x8] sm:$0xff]
        %164 = vset.pattern.permute.xlu0 0
        %165 = vperm.xlu0 %164, %v161
        %v166 = vpop.permute.xlu0 %165
        %169 = vset.pattern.permute.xlu0 0
        %170 = vperm.xlu0 %169, %v162
        %v171 = vpop.permute.xlu0 %170
        %v173 = vmul.f32 %v159, %v166
        %v174 = vmul.f32 %v160, %v171
        %v175 = vld [vmem:[#allocation2] sm:$0xff]
        %v176 = vadd.f32 %v173, %v174
        %v177 = vadd.f32 %v175, %v176
        %178 = vst [vmem:[#allocation2] sm:$0xff] %v177
        %p179 = scmp.eq.s32.totalorder %s14, 3
        // Predicated region
        $region33: #{tpu_custom_call.1} parent=27 // pred_check
          %p180 = pneg %p179
        $region34: #{tpu_custom_call.1} parent=27 // pred_check_branch
          %182 = sbr.rel (%p180) target = $region36
        $region35: #{tpu_custom_call.1} parent=27 // pred_region
          %v183 = vld [vmem:[#allocation2] sm:$0xff]
          %v184 = vrot.slane %v183, 4
          %v185 = vadd.f32 %v183, %v184
          %v186 = vrot.slane %v185, 2
          %v187 = vadd.f32 %v185, %v186
          %v188 = vrot.slane %v187, 1
          %v189 = vadd.f32 %v187, %v188
          %v190 = vmul.f32 %v189, %v189
          %vm191 = vcmask 1040384
          %v192 = vsel %vm191, %v190, 0.0
          %193 = vadd.xlane.f32.xlu0 %v192
          %v194 = vpop.xlane.xlu0 %193
          %v195 = vrot.slane %v194, 4
          %v196 = vadd.f32 %v194, %v195
          %v197 = vrot.slane %v196, 2
          %v198 = vadd.f32 %v196, %v197
          %v199 = vrot.slane %v198, 1
          %v200 = vadd.f32 %v198, %v199
          %s201 = vtos %v200
          %s202 = smul.f32 %s201, 2.0
          %s203 = smul.f32 %s202, 0.020833334
          %s204 = scalar_lea.smem [#allocation3], 0
          %205 = sst [smem:[%s204]] %s203
        $region36: #{tpu_custom_call.1} parent=27 // pred_fallthru
          _
        // Predicated region
        $region37: #{tpu_custom_call.1} parent=27 // pred_check
          %p206 = pneg %p79
        $region38: #{tpu_custom_call.1} parent=27 // pred_check_branch
          %208 = sbr.rel (%p206) target = $region40
        $region39: #{tpu_custom_call.1} parent=27 // pred_region
          %210 = vsyncadd [#allocation4], 0
          %s212 = sshll.u32 %s2, 4
          %s213 = int_to_ptr.hbm [resolvable:$true] %s212
          %215 = dma.smem_to_hbm [#allocation3], 16, %s213, [#allocation4]
        $region40: #{tpu_custom_call.1} parent=27 // pred_fallthru
          _
        // Predicated region
        $region41: #{tpu_custom_call.1} parent=27 // pred_check
          %p216 = pneg %p79
        $region42: #{tpu_custom_call.1} parent=27 // pred_check_branch
          %218 = sbr.rel (%p216) target = $region44
        $region43: #{tpu_custom_call.1} parent=27 // pred_region
          %220 = dma.done [#allocation4], 16
        $region44: #{tpu_custom_call.1} parent=27 // pred_fallthru
          _
        %221 = sfence
      $region28: #{tpu_custom_call.1} parent=5 // pred_fallthru
        _
      %p222 = scmp.le.s32.totalorder 2, %s9
      // Predicated region
      $region45: #{tpu_custom_call.1} parent=5 // pred_check
        %p223 = pneg %p222
      $region46: #{tpu_custom_call.1} parent=5 // pred_check_branch
        %225 = sbr.rel (%p223) target = $region48
      $region47: #{tpu_custom_call.1} parent=5 // pred_region
        %s226 = ssub.s32 %s9, 2
      $region48: #{tpu_custom_call.1} parent=5 // pred_fallthru
        _
    $region6: #{tpu_custom_call.1} parent=1 // loop_footer
      %s13 = sadd.s32 1, %s9
    $region7: #{tpu_custom_call.1} parent=1 // loop_footer_branch
      %8 = sbr.rel target = $region3
    $region8: #{tpu_custom_call.1} parent=1 // loop_exit
      _
    %227 = vsyncpa [#allocation4], 1
    %s228 = scalar_lea.sflag [#allocation4], 1
    %229 = vsyncpa %s228, 1

</llo_original>
